<compile_context>
chip_gen: v5e
topology: v5e:2x2
jax: 0.10.0
libtpu: 0.0.40
codegen_flags: <defaults>
</compile_context>

<pallas_src>
import functools

import jax
import jax.numpy as jnp
import numpy as np
from jax.experimental import pallas as pl
from jax.experimental.pallas import tpu as pltpu

EPS = 1e-5
DILATIONS = (1, 2, 4, 8, 16)


# --------------------------------- kernel -----------------------------------
def _block_a_kernel(add_residual, offsets, seg_len,
                    x_ref, wc1_ref, t1_ref, wcat_ref, t2_ref,
                    a1_ref, a2_ref, out_ref, hcat_ref):
    x = x_ref[...]                                   # (nIn, lanes) bf16
    lanes = x.shape[1]
    n = wc1_ref.shape[0]
    n_in = x.shape[0]

    # c1 (1x1 conv); BN1 scale folded into wc1, conv bias + BN1 shift in t1.
    h = jnp.dot(wc1_ref[...], x, preferred_element_type=jnp.float32)   # (n, lanes) f32
    h = h + t1_ref[...]
    a1 = a1_ref[0]
    h = jnp.where(h > 0, h, a1 * h)                  # PReLU (single shared alpha)

    # Per-batch-segment lane index (batch is folded into the lane axis; block
    # starts are multiples of seg_len, so lane % seg_len is the in-sequence
    # position).  Hoisted once; power-of-two fast path avoids the rem.
    lane = jax.lax.broadcasted_iota(jnp.int32, (n, lanes), 1)
    if (seg_len & (seg_len - 1)) == 0:
        lane_in_seg = jnp.bitwise_and(lane, seg_len - 1)
    else:
        lane_in_seg = lane % seg_len
    zero = jnp.zeros_like(h)                         # hoisted (no per-iter broadcast)

    # Build H_cat in VMEM: row-block 0 is the merged centre tap of all five
    # dilations; blocks 1..10 are the +/-d shifted (and boundary-masked) taps.
    hcat_ref[0:n, :] = h
    for i in range(1, len(offsets)):
        off = offsets[i]                             # static: +/- dilation
        rolled = pltpu.roll(h, (-off) % lanes, 1)    # rolled[l] = h[l + off]
        if off < 0:
            mask = lane_in_seg >= (-off)
        else:
            mask = lane_in_seg < (seg_len - off)
        hcat_ref[i * n:(i + 1) * n, :] = jnp.where(mask, rolled, zero)

    if add_residual:                                 # residual rides the matmul
        nk = len(offsets) * n
        hcat_ref[nk:nk + n_in, :] = x.astype(jnp.float32)

    # Single fused MXU matmul: W_cat (nOut, K) @ H_cat (K, lanes), f32 acc.
    acc = jnp.dot(wcat_ref[...], hcat_ref[...], preferred_element_type=jnp.float32)

    y = acc + t2_ref[...]                            # BN2 shift
    a2 = a2_ref[0]
    y = jnp.where(y > 0, y, a2 * y)                  # PReLU (single shared alpha)
    out_ref[...] = y.astype(out_ref.dtype)


# ------------------------------ weight folding ------------------------------
def _fold_bn(gamma, beta, mean, var):
    scale = gamma / jnp.sqrt(var + EPS)
    shift = beta - mean * scale
    return scale, shift


def _build_fused_weight(params, s2, add, n_in):
    """Fold channel-concat + prefix sums + BN2 scale (+ residual) into one
    2D weight W_cat (nOut, K).  Column blocks match the H_cat row blocks built
    in the kernel: [merged centre tap | (-1,+1,-2,+2,...,-16,+16) | residual]."""
    n_out = s2.shape[0]
    n = params["wc1"].shape[0]
    n1 = params["wd1"].shape[0]
    seg_start = [0, n1, n1 + n, n1 + 2 * n, n1 + 3 * n]
    seg_size = [n1, n, n, n, n]
    # which output segments (d1, add1..add4) each dilation branch feeds
    members = {1: (0,), 2: (1, 2, 3, 4), 4: (2, 3, 4), 8: (3, 4), 16: (4,)}
    wds = {1: params["wd1"], 2: params["wd2"], 4: params["wd4"],
           8: params["wd8"], 16: params["wd16"]}

    def tap_matrix(d, k):
        w = wds[d][:, :, k].astype(jnp.float32)      # (Cout_d, n)
        m = jnp.zeros((n_out, n), jnp.float32)
        for s in members[d]:
            m = m.at[seg_start[s]:seg_start[s] + seg_size[s], :].set(w)
        return m

    cols = [sum(tap_matrix(d, 1) for d in DILATIONS)]        # merged centre tap
    offs = [0]
    for d in DILATIONS:
        cols.append(tap_matrix(d, 0)); offs.append(-d)       # left tap  (x[l-d])
        cols.append(tap_matrix(d, 2)); offs.append(+d)       # right tap (x[l+d])
    wcat = jnp.concatenate(cols, axis=1) * s2[:, None]       # fold BN2 scale
    if add:                                                   # residual: diag(s2)
        wcat = jnp.concatenate([wcat, jnp.diag(s2)], axis=1)  # (nIn == nOut here)
    return wcat.astype(jnp.float32), tuple(offs)


def _pick_batch_fold(b, l, target_lanes=2048, min_steps=4):
    """How many batch elements to fold into one grid step's lane axis."""
    if l % 128 != 0:
        return b                       # single full-array block stays legal
    bb_cap = max(1, min(b, max(1, target_lanes // l)))
    if b >= min_steps:                 # keep >= min_steps grid steps when we can
        bb_cap = min(bb_cap, max(1, b // min_steps))   # (2 per v7x TensorCore)
    bb = 1
    for c in range(1, bb_cap + 1):
        if b % c == 0:
            bb = c
    return bb


# --------------------------------- wrapper ----------------------------------
def dilated_conv_block_a(x_ncl, params, add=True, out_dtype=jnp.bfloat16):
    """x_ncl: (B, nIn, L), PyTorch NCL layout. Returns (B, nOut, L) out_dtype."""
    B, n_in, L = x_ncl.shape
    n_out = params["bn2_gamma"].shape[0]
    n = params["wc1"].shape[0]
    if n_in != n_out:
        add = False

    s1, t1 = _fold_bn(params["bn1_gamma"], params["bn1_beta"],
                      params["bn1_mean"], params["bn1_var"])
    s2, t2 = _fold_bn(params["bn2_gamma"], params["bn2_beta"],
                      params["bn2_mean"], params["bn2_var"])

    # c1 + BN1 folded:  h = (s1 * wc1) @ x + (s1 * bc1 + bn1_shift)
    wc1_bf = (params["wc1"] * s1[:, None]).astype(jnp.bfloat16)          # (n, nIn)
    t1p = (s1 * params["bc1"] + t1).reshape(n, 1).astype(jnp.float32)

    wcat, offs = _build_fused_weight(params, s2, add, n_in)              # (nOut, K)
    k_total = wcat.shape[1]

    t2c = t2.reshape(n_out, 1).astype(jnp.float32)
    a1 = jnp.asarray(params["prelu1"], jnp.float32).reshape(1)
    a2 = jnp.asarray(params["prelu2"], jnp.float32).reshape(1)

    # Fold batch into the lane axis: (B, nIn, L) -> (nIn, B*L), bf16 MXU input.
    x2d = jnp.transpose(x_ncl, (1, 0, 2)).reshape(n_in, B * L).astype(jnp.bfloat16)

    bb = _pick_batch_fold(B, L)
    lanes = bb * L
    steps = B // bb
    out_isz = np.dtype(out_dtype).itemsize

    # VMEM budget (double-buffered I/O + scratch + weights); keep it explicit
    # and under the v7x 64 MiB VMEM.
    vmem_est = (2 * n_in * lanes * 2 + 2 * n_out * lanes * out_isz
                + k_total * lanes * 4 + wcat.size * 4 + wc1_bf.size * 2 + 4096)
    vmem_limit = int(min(48 * 2**20, max(32 * 2**20, 2 * vmem_est)))

    cost = pl.CostEstimate(
        flops=2 * B * L * (n * n_in + n_out * k_total),
        transcendentals=0,
        bytes_accessed=int(x2d.size * 2 + B * n_out * L * out_isz
                           + wcat.size * 4 + wc1_bf.size * 2),
    )

    out2d = pl.pallas_call(
        functools.partial(_block_a_kernel, add, offs, L),
        out_shape=jax.ShapeDtypeStruct((n_out, B * L), out_dtype),
        grid=(steps,),
        in_specs=[
            pl.BlockSpec((n_in, lanes), lambda i: (0, i)),
            pl.BlockSpec((n, n_in), lambda i: (0, 0)),
            pl.BlockSpec((n, 1), lambda i: (0, 0)),
            pl.BlockSpec((n_out, k_total), lambda i: (0, 0)),
            pl.BlockSpec((n_out, 1), lambda i: (0, 0)),
            pl.BlockSpec(memory_space=pltpu.MemorySpace.SMEM),
            pl.BlockSpec(memory_space=pltpu.MemorySpace.SMEM),
        ],
        out_specs=pl.BlockSpec((n_out, lanes), lambda i: (0, i)),
        scratch_shapes=[pltpu.VMEM((k_total, lanes), jnp.float32)],
        compiler_params=pltpu.CompilerParams(
            dimension_semantics=("parallel",),
            vmem_limit_bytes=vmem_limit),
        cost_estimate=cost,
    )(x2d, wc1_bf, t1p, wcat, t2c, a1, a2)

    return out2d.reshape(n_out, B, L).transpose(1, 0, 2)


# ---------------- pure-JAX reference (for verification only) ----------------
def _ref_forward(x, p, add=True):
    def conv1d(x, w, b=None, d=1, pad=0):
        y = jax.lax.conv_general_dilated(
            x, w, window_strides=(1,), padding=[(pad, pad)],
            rhs_dilation=(d,), dimension_numbers=("NCH", "OIH", "NCH"))
        if b is not None:
            y = y + b[None, :, None]
        return y

    def bn(x, g, bt, m, v):
        return (x - m[None, :, None]) / jnp.sqrt(v[None, :, None] + EPS) \
            * g[None, :, None] + bt[None, :, None]

    def prelu(x, a):
        return jnp.where(x > 0, x, a * x)

    nIn, n_out = x.shape[1], p["bn2_gamma"].shape[0]
    if nIn != n_out:
        add = False
    h = conv1d(x, p["wc1"][:, :, None], p["bc1"])
    h = prelu(bn(h, p["bn1_gamma"], p["bn1_beta"], p["bn1_mean"], p["bn1_var"]),
              p["prelu1"])
    d1 = conv1d(h, p["wd1"], d=1, pad=1)
    d2 = conv1d(h, p["wd2"], d=2, pad=2)
    d4 = conv1d(h, p["wd4"], d=4, pad=4)
    d8 = conv1d(h, p["wd8"], d=8, pad=8)
    d16 = conv1d(h, p["wd16"], d=16, pad=16)
    add1 = d2
    add2 = add1 + d4
    add3 = add2 + d8
    add4 = add3 + d16
    comb = jnp.concatenate([d1, add1, add2, add3, add4], axis=1)
    if add:
        comb = x + comb
    return prelu(bn(comb, p["bn2_gamma"], p["bn2_beta"], p["bn2_mean"], p["bn2_var"]),
                 p["prelu2"])


def _make_params(key, nIn, nOut):
    n = nOut // 5
    n1 = nOut - 4 * n
    ks = jax.random.split(key, 12)
    nrm = lambda k, s: (0.1 * jax.random.normal(k, s)).astype(jnp.float32)
    return {
        "wc1": nrm(ks[0], (n, nIn)),
        "bc1": nrm(ks[1], (n,)),
        "bn1_gamma": 1.0 + 0.1 * jax.random.normal(ks[2], (n,)).astype(jnp.float32),
        "bn1_beta": nrm(ks[3], (n,)),
        "bn1_mean": nrm(ks[4], (n,)),
        "bn1_var": 0.5 + jnp.abs(jax.random.normal(ks[5], (n,))).astype(jnp.float32),
        "prelu1": jnp.float32(0.25),
        "wd1": nrm(ks[6], (n1, n, 3)),
        "wd2": nrm(ks[7], (n, n, 3)),
        "wd4": nrm(ks[8], (n, n, 3)),
        "wd8": nrm(ks[9], (n, n, 3)),
        "wd16": nrm(ks[10], (n, n, 3)),
        "bn2_gamma": 1.0 + 0.1 * jax.random.normal(ks[11], (nOut,)).astype(jnp.float32),
        "bn2_beta": jnp.linspace(-0.1, 0.1, nOut).astype(jnp.float32),
        "bn2_mean": jnp.linspace(-0.05, 0.05, nOut).astype(jnp.float32),
        "bn2_var": jnp.linspace(0.8, 1.2, nOut).astype(jnp.float32),
        "prelu2": jnp.float32(0.25),
    }


if __name__ == "__main__":
    # nIn == nOut -> residual add is active; L multiple of 128 -> lane-dense.
    B, nIn, nOut, L = 2, 20, 20, 256
    key = jax.random.PRNGKey(0)
    kx, kp = jax.random.split(key)
    x = jax.random.normal(kx, (B, nIn, L), dtype=jnp.float32)   # PyTorch NCL layout
    params = _make_params(kp, nIn, nOut)

    out = dilated_conv_block_a(x, params, add=True)             # bf16 output
    out = jax.block_until_ready(out)

    ref = _ref_forward(x, params, add=True)
    # bf16 MXU input + bf16 output (f32 accumulation inside) -> loose tolerance.
    np.testing.assert_allclose(np.asarray(out.astype(jnp.float32)), np.asarray(ref),
                               rtol=5e-2, atol=5e-2)

    print("KERNEL_OK")
</pallas_src>

<mosaic_0001>
module attributes {stable_mosaic.version = 11 : i64} {
  func.func @_block_a_kernel(%arg0: i32, %arg1: memref<20x512xbf16, #tpu.memory_space<vmem>>, %arg2: memref<4x20xbf16, #tpu.memory_space<vmem>>, %arg3: memref<4x1xf32, #tpu.memory_space<vmem>>, %arg4: memref<20x64xf32, #tpu.memory_space<vmem>>, %arg5: memref<20x1xf32, #tpu.memory_space<vmem>>, %arg6: memref<1xf32, #tpu.memory_space<smem>>, %arg7: memref<1xf32, #tpu.memory_space<smem>>, %arg8: memref<20x512xbf16, #tpu.memory_space<vmem>>, %arg9: memref<64x512xf32, #tpu.memory_space<vmem>>) attributes {dimension_semantics = [#tpu.dimension_semantics<parallel>], iteration_bounds = array<i64: 1>, scalar_prefetch = 0 : i64, scratch_operands = 1 : i64, tpu.core_type = #tpu.core_type<tc>, window_params = [{transform_indices = @transform_0, window_bounds = array<i64: 20, 512>}, {pipeline_mode = #tpu.pipeline_mode<synchronous>, transform_indices = @transform_1, window_bounds = array<i64: 4, 20>}, {pipeline_mode = #tpu.pipeline_mode<synchronous>, transform_indices = @transform_2, window_bounds = array<i64: 4, 1>}, {pipeline_mode = #tpu.pipeline_mode<synchronous>, transform_indices = @transform_3, window_bounds = array<i64: 20, 64>}, {pipeline_mode = #tpu.pipeline_mode<synchronous>, transform_indices = @transform_4, window_bounds = array<i64: 20, 1>}, {transform_indices = @transform_5, window_bounds = array<i64: 1>}, {transform_indices = @transform_6, window_bounds = array<i64: 1>}, {transform_indices = @transform_7, window_bounds = array<i64: 20, 512>}]} {
    %c0 = arith.constant 0 : index
    %c0_0 = arith.constant 0 : index
    %0 = vector.load %arg1[%c0, %c0_0] : memref<20x512xbf16, #tpu.memory_space<vmem>>, vector<20x512xbf16>
    %c0_1 = arith.constant 0 : index
    %c0_2 = arith.constant 0 : index
    %1 = vector.load %arg2[%c0_1, %c0_2] : memref<4x20xbf16, #tpu.memory_space<vmem>>, vector<4x20xbf16>
    %cst = arith.constant dense<0.000000e+00> : vector<4x512xf32>
    %2 = tpu.matmul %1, %0, %cst {dimension_numbers = #tpu.dot_dimension_numbers<[1], [0], [0], [1], [0, 0, 1, 1], [], []>} : vector<4x20xbf16>, vector<20x512xbf16>, vector<4x512xf32> -> vector<4x512xf32>
    %c0_3 = arith.constant 0 : index
    %c0_4 = arith.constant 0 : index
    %3 = vector.load %arg3[%c0_3, %c0_4] : memref<4x1xf32, #tpu.memory_space<vmem>>, vector<4x1xf32>
    %4 = vector.broadcast %3 : vector<4x1xf32> to vector<4x512xf32>
    %5 = arith.addf %2, %4 : vector<4x512xf32>
    %c0_5 = arith.constant 0 : index
    %6 = memref.load %arg6[%c0_5] : memref<1xf32, #tpu.memory_space<smem>>
    %cst_6 = arith.constant 0.000000e+00 : f32
    %7 = vector.broadcast %cst_6 : f32 to vector<4x512xf32>
    %8 = arith.cmpf ogt, %5, %7 : vector<4x512xf32>
    %9 = vector.broadcast %6 : f32 to vector<4x512xf32>
    %10 = arith.mulf %9, %5 : vector<4x512xf32>
    %11 = arith.select %8, %5, %10 : vector<4x512xi1>, vector<4x512xf32>
    %12 = tpu.iota {dimensions = array<i32: 1>} : vector<4x512xi32>
    %c255_i32 = arith.constant 255 : i32
    %13 = vector.broadcast %c255_i32 : i32 to vector<4x512xi32>
    %14 = arith.andi %12, %13 : vector<4x512xi32>
    %cst_7 = arith.constant 0.000000e+00 : f32
    %15 = vector.broadcast %cst_7 : f32 to vector<4x512xf32>
    %c0_8 = arith.constant 0 : index
    %c0_9 = arith.constant 0 : index
    %16 = vector.load %arg9[%c0_8, %c0_9] : memref<64x512xf32, #tpu.memory_space<vmem>>, vector<4x512xf32>
    tpu.vector_store %arg9[%c0_8, %c0_9], %11 {strides = array<i32>} : memref<64x512xf32, #tpu.memory_space<vmem>>, vector<4x512xf32>,
    %c1_i32 = arith.constant 1 : i32
    %17 = tpu.dynamic_rotate %11 by %c1_i32 dim 1 : vector<4x512xf32>, i32 -> vector<4x512xf32>
    %c1_i32_10 = arith.constant 1 : i32
    %18 = vector.broadcast %c1_i32_10 : i32 to vector<4x512xi32>
    %19 = arith.cmpi sge, %14, %18 : vector<4x512xi32>
    %20 = arith.select %19, %17, %15 : vector<4x512xi1>, vector<4x512xf32>
    %c4 = arith.constant 4 : index
    %c0_11 = arith.constant 0 : index
    %21 = vector.load %arg9[%c4, %c0_11] : memref<64x512xf32, #tpu.memory_space<vmem>>, vector<4x512xf32>
    tpu.vector_store %arg9[%c4, %c0_11], %20 {strides = array<i32>} : memref<64x512xf32, #tpu.memory_space<vmem>>, vector<4x512xf32>,
    %c511_i32 = arith.constant 511 : i32
    %22 = tpu.dynamic_rotate %11 by %c511_i32 dim 1 : vector<4x512xf32>, i32 -> vector<4x512xf32>
    %c255_i32_12 = arith.constant 255 : i32
    %23 = vector.broadcast %c255_i32_12 : i32 to vector<4x512xi32>
    %24 = arith.cmpi slt, %14, %23 : vector<4x512xi32>
    %25 = arith.select %24, %22, %15 : vector<4x512xi1>, vector<4x512xf32>
    %c8 = arith.constant 8 : index
    %c0_13 = arith.constant 0 : index
    %26 = vector.load %arg9[%c8, %c0_13] : memref<64x512xf32, #tpu.memory_space<vmem>>, vector<4x512xf32>
    tpu.vector_store %arg9[%c8, %c0_13], %25 {strides = array<i32>} : memref<64x512xf32, #tpu.memory_space<vmem>>, vector<4x512xf32>,
    %c2_i32 = arith.constant 2 : i32
    %27 = tpu.dynamic_rotate %11 by %c2_i32 dim 1 : vector<4x512xf32>, i32 -> vector<4x512xf32>
    %c2_i32_14 = arith.constant 2 : i32
    %28 = vector.broadcast %c2_i32_14 : i32 to vector<4x512xi32>
    %29 = arith.cmpi sge, %14, %28 : vector<4x512xi32>
    %30 = arith.select %29, %27, %15 : vector<4x512xi1>, vector<4x512xf32>
    %c12 = arith.constant 12 : index
    %c0_15 = arith.constant 0 : index
    %31 = vector.load %arg9[%c12, %c0_15] : memref<64x512xf32, #tpu.memory_space<vmem>>, vector<4x512xf32>
    tpu.vector_store %arg9[%c12, %c0_15], %30 {strides = array<i32>} : memref<64x512xf32, #tpu.memory_space<vmem>>, vector<4x512xf32>,
    %c510_i32 = arith.constant 510 : i32
    %32 = tpu.dynamic_rotate %11 by %c510_i32 dim 1 : vector<4x512xf32>, i32 -> vector<4x512xf32>
    %c254_i32 = arith.constant 254 : i32
    %33 = vector.broadcast %c254_i32 : i32 to vector<4x512xi32>
    %34 = arith.cmpi slt, %14, %33 : vector<4x512xi32>
    %35 = arith.select %34, %32, %15 : vector<4x512xi1>, vector<4x512xf32>
    %c16 = arith.constant 16 : index
    %c0_16 = arith.constant 0 : index
    %36 = vector.load %arg9[%c16, %c0_16] : memref<64x512xf32, #tpu.memory_space<vmem>>, vector<4x512xf32>
    tpu.vector_store %arg9[%c16, %c0_16], %35 {strides = array<i32>} : memref<64x512xf32, #tpu.memory_space<vmem>>, vector<4x512xf32>,
    %c4_i32 = arith.constant 4 : i32
    %37 = tpu.dynamic_rotate %11 by %c4_i32 dim 1 : vector<4x512xf32>, i32 -> vector<4x512xf32>
    %c4_i32_17 = arith.constant 4 : i32
    %38 = vector.broadcast %c4_i32_17 : i32 to vector<4x512xi32>
    %39 = arith.cmpi sge, %14, %38 : vector<4x512xi32>
    %40 = arith.select %39, %37, %15 : vector<4x512xi1>, vector<4x512xf32>
    %c20 = arith.constant 20 : index
    %c0_18 = arith.constant 0 : index
    %41 = vector.load %arg9[%c20, %c0_18] : memref<64x512xf32, #tpu.memory_space<vmem>>, vector<4x512xf32>
    tpu.vector_store %arg9[%c20, %c0_18], %40 {strides = array<i32>} : memref<64x512xf32, #tpu.memory_space<vmem>>, vector<4x512xf32>,
    %c508_i32 = arith.constant 508 : i32
    %42 = tpu.dynamic_rotate %11 by %c508_i32 dim 1 : vector<4x512xf32>, i32 -> vector<4x512xf32>
    %c252_i32 = arith.constant 252 : i32
    %43 = vector.broadcast %c252_i32 : i32 to vector<4x512xi32>
    %44 = arith.cmpi slt, %14, %43 : vector<4x512xi32>
    %45 = arith.select %44, %42, %15 : vector<4x512xi1>, vector<4x512xf32>
    %c24 = arith.constant 24 : index
    %c0_19 = arith.constant 0 : index
    %46 = vector.load %arg9[%c24, %c0_19] : memref<64x512xf32, #tpu.memory_space<vmem>>, vector<4x512xf32>
    tpu.vector_store %arg9[%c24, %c0_19], %45 {strides = array<i32>} : memref<64x512xf32, #tpu.memory_space<vmem>>, vector<4x512xf32>,
    %c8_i32 = arith.constant 8 : i32
    %47 = tpu.dynamic_rotate %11 by %c8_i32 dim 1 : vector<4x512xf32>, i32 -> vector<4x512xf32>
    %c8_i32_20 = arith.constant 8 : i32
    %48 = vector.broadcast %c8_i32_20 : i32 to vector<4x512xi32>
    %49 = arith.cmpi sge, %14, %48 : vector<4x512xi32>
    %50 = arith.select %49, %47, %15 : vector<4x512xi1>, vector<4x512xf32>
    %c28 = arith.constant 28 : index
    %c0_21 = arith.constant 0 : index
    %51 = vector.load %arg9[%c28, %c0_21] : memref<64x512xf32, #tpu.memory_space<vmem>>, vector<4x512xf32>
    tpu.vector_store %arg9[%c28, %c0_21], %50 {strides = array<i32>} : memref<64x512xf32, #tpu.memory_space<vmem>>, vector<4x512xf32>,
    %c504_i32 = arith.constant 504 : i32
    %52 = tpu.dynamic_rotate %11 by %c504_i32 dim 1 : vector<4x512xf32>, i32 -> vector<4x512xf32>
    %c248_i32 = arith.constant 248 : i32
    %53 = vector.broadcast %c248_i32 : i32 to vector<4x512xi32>
    %54 = arith.cmpi slt, %14, %53 : vector<4x512xi32>
    %55 = arith.select %54, %52, %15 : vector<4x512xi1>, vector<4x512xf32>
    %c32 = arith.constant 32 : index
    %c0_22 = arith.constant 0 : index
    %56 = vector.load %arg9[%c32, %c0_22] : memref<64x512xf32, #tpu.memory_space<vmem>>, vector<4x512xf32>
    tpu.vector_store %arg9[%c32, %c0_22], %55 {strides = array<i32>} : memref<64x512xf32, #tpu.memory_space<vmem>>, vector<4x512xf32>,
    %c16_i32 = arith.constant 16 : i32
    %57 = tpu.dynamic_rotate %11 by %c16_i32 dim 1 : vector<4x512xf32>, i32 -> vector<4x512xf32>
    %c16_i32_23 = arith.constant 16 : i32
    %58 = vector.broadcast %c16_i32_23 : i32 to vector<4x512xi32>
    %59 = arith.cmpi sge, %14, %58 : vector<4x512xi32>
    %60 = arith.select %59, %57, %15 : vector<4x512xi1>, vector<4x512xf32>
    %c36 = arith.constant 36 : index
    %c0_24 = arith.constant 0 : index
    %61 = vector.load %arg9[%c36, %c0_24] : memref<64x512xf32, #tpu.memory_space<vmem>>, vector<4x512xf32>
    tpu.vector_store %arg9[%c36, %c0_24], %60 {strides = array<i32>} : memref<64x512xf32, #tpu.memory_space<vmem>>, vector<4x512xf32>,
    %c496_i32 = arith.constant 496 : i32
    %62 = tpu.dynamic_rotate %11 by %c496_i32 dim 1 : vector<4x512xf32>, i32 -> vector<4x512xf32>
    %c240_i32 = arith.constant 240 : i32
    %63 = vector.broadcast %c240_i32 : i32 to vector<4x512xi32>
    %64 = arith.cmpi slt, %14, %63 : vector<4x512xi32>
    %65 = arith.select %64, %62, %15 : vector<4x512xi1>, vector<4x512xf32>
    %c40 = arith.constant 40 : index
    %c0_25 = arith.constant 0 : index
    %66 = vector.load %arg9[%c40, %c0_25] : memref<64x512xf32, #tpu.memory_space<vmem>>, vector<4x512xf32>
    tpu.vector_store %arg9[%c40, %c0_25], %65 {strides = array<i32>} : memref<64x512xf32, #tpu.memory_space<vmem>>, vector<4x512xf32>,
    %67 = arith.extf %0 : vector<20x512xbf16> to vector<20x512xf32>
    %c44 = arith.constant 44 : index
    %c0_26 = arith.constant 0 : index
    %68 = vector.load %arg9[%c44, %c0_26] : memref<64x512xf32, #tpu.memory_space<vmem>>, vector<20x512xf32>
    tpu.vector_store %arg9[%c44, %c0_26], %67 {strides = array<i32>} : memref<64x512xf32, #tpu.memory_space<vmem>>, vector<20x512xf32>,
    %c0_27 = arith.constant 0 : index
    %c0_28 = arith.constant 0 : index
    %69 = vector.load %arg4[%c0_27, %c0_28] : memref<20x64xf32, #tpu.memory_space<vmem>>, vector<20x64xf32>
    %c0_29 = arith.constant 0 : index
    %c0_30 = arith.constant 0 : index
    %70 = vector.load %arg9[%c0_29, %c0_30] : memref<64x512xf32, #tpu.memory_space<vmem>>, vector<64x512xf32>
    %cst_31 = arith.constant dense<0.000000e+00> : vector<20x512xf32>
    %71 = tpu.matmul %69, %70, %cst_31 {dimension_numbers = #tpu.dot_dimension_numbers<[1], [0], [0], [1], [0, 0, 1, 1], [], []>} : vector<20x64xf32>, vector<64x512xf32>, vector<20x512xf32> -> vector<20x512xf32>
    %c0_32 = arith.constant 0 : index
    %c0_33 = arith.constant 0 : index
    %72 = vector.load %arg5[%c0_32, %c0_33] : memref<20x1xf32, #tpu.memory_space<vmem>>, vector<20x1xf32>
    %73 = vector.broadcast %72 : vector<20x1xf32> to vector<20x512xf32>
    %74 = arith.addf %71, %73 : vector<20x512xf32>
    %c0_34 = arith.constant 0 : index
    %75 = memref.load %arg7[%c0_34] : memref<1xf32, #tpu.memory_space<smem>>
    %cst_35 = arith.constant 0.000000e+00 : f32
    %76 = vector.broadcast %cst_35 : f32 to vector<20x512xf32>
    %77 = arith.cmpf ogt, %74, %76 : vector<20x512xf32>
    %78 = vector.broadcast %75 : f32 to vector<20x512xf32>
    %79 = arith.mulf %78, %74 : vector<20x512xf32>
    %80 = arith.select %77, %74, %79 : vector<20x512xi1>, vector<20x512xf32>
    %81 = arith.truncf %80 : vector<20x512xf32> to vector<20x512xbf16>
    %c0_36 = arith.constant 0 : index
    %c0_37 = arith.constant 0 : index
    %82 = vector.load %arg8[%c0_36, %c0_37] : memref<20x512xbf16, #tpu.memory_space<vmem>>, vector<20x512xbf16>
    tpu.vector_store %arg8[%c0_36, %c0_37], %81 {strides = array<i32>} : memref<20x512xbf16, #tpu.memory_space<vmem>>, vector<20x512xbf16>,
    return
  }
  func.func @transform_0(%arg0: i32) -> (i32, i32) {
    %c0_i32 = arith.constant 0 : i32
    %c0_i32_0 = arith.constant 0 : i32
    return %c0_i32, %arg0 : i32, i32
  }
  func.func @transform_1(%arg0: i32) -> (i32, i32) {
    %c0_i32 = arith.constant 0 : i32
    %c0_i32_0 = arith.constant 0 : i32
    %c0_i32_1 = arith.constant 0 : i32
    return %c0_i32, %c0_i32_0 : i32, i32
  }
  func.func @transform_2(%arg0: i32) -> (i32, i32) {
    %c0_i32 = arith.constant 0 : i32
    %c0_i32_0 = arith.constant 0 : i32
    %c0_i32_1 = arith.constant 0 : i32
    return %c0_i32, %c0_i32_0 : i32, i32
  }
  func.func @transform_3(%arg0: i32) -> (i32, i32) {
    %c0_i32 = arith.constant 0 : i32
    %c0_i32_0 = arith.constant 0 : i32
    %c0_i32_1 = arith.constant 0 : i32
    return %c0_i32, %c0_i32_0 : i32, i32
  }
  func.func @transform_4(%arg0: i32) -> (i32, i32) {
    %c0_i32 = arith.constant 0 : i32
    %c0_i32_0 = arith.constant 0 : i32
    %c0_i32_1 = arith.constant 0 : i32
    return %c0_i32, %c0_i32_0 : i32, i32
  }
  func.func @transform_5(%arg0: i32) -> i32 {
    %c0_i32 = arith.constant 0 : i32
    %c0_i32_0 = arith.constant 0 : i32
    return %c0_i32 : i32
  }
  func.func @transform_6(%arg0: i32) -> i32 {
    %c0_i32 = arith.constant 0 : i32
    %c0_i32_0 = arith.constant 0 : i32
    return %c0_i32 : i32
  }
  func.func @transform_7(%arg0: i32) -> (i32, i32) {
    %c0_i32 = arith.constant 0 : i32
    %c0_i32_0 = arith.constant 0 : i32
    return %c0_i32, %arg0 : i32, i32
  }
}

</mosaic_0001>

<llo_original>
// kernel: tpu_custom_call.1
$region0: #{tpu_custom_call.1}
  #allocation0 [shape = 'u32[]', space=smem, size = 0x4, offset = 0x4, fixed_abs, tag = 'smem constant byte address 0x4 - core index']
  #allocation1 [shape = 'u32[72,128]{1,0:T(1,128)}', space=vmem, size = 0x9000, scoped, tag = 'internal scratch']
  #allocation2 [shape = 'f32[64,512]{1,0:T(8,128)}', space=vmem, size = 0x20000, scoped, tag = 'scratch operand']
  #allocation3 [shape = 'f32[1]{0:T(128)S(6)}', space=smem, size = 0x200, scoped, tag = 'scoped memory for tpu_custom_call.1']
  #allocation4 [shape = 'f32[1]{0:T(128)S(6)}', space=smem, size = 0x200, scoped, tag = 'scoped memory for tpu_custom_call.1']
  %s0 = inlined_call_operand.hbm [shape: bf16[20,512], index: 0, kind: input, shape index: {}]
  %s1 = inlined_call_operand.vmem [shape: bf16[4,20], index: 1, kind: input, shape index: {}]
  %s2 = inlined_call_operand.vmem [shape: f32[4,1], index: 2, kind: input, shape index: {}]
  %s3 = inlined_call_operand.vmem [shape: f32[20,64], index: 3, kind: input, shape index: {}]
  %s4 = inlined_call_operand.vmem [shape: f32[20,1], index: 4, kind: input, shape index: {}]
  %s5 = inlined_call_operand.<no memory space> [shape: f32[1], index: 5, kind: input, shape index: {}]
  %s6 = inlined_call_operand.<no memory space> [shape: f32[1], index: 6, kind: input, shape index: {}]
  %s7 = inlined_call_operand.hbm [shape: bf16[20,512], index: 7, kind: output, shape index: {}]
  %s8 = sld [smem:[#allocation0]]
  $region42: #{tpu_custom_call.1} parent=0
    _
  %s10 = ssub.s32 1, %s8
  %s11 = scalar_select 0, %s10, %s8
  %12 = sst [smem:[#allocation3]] %s5
  %13 = sst [smem:[#allocation4]] %s6
  $region1: #{tpu_custom_call.1} parent=0
    #allocation5 [shape = 'u8[24576]{0}', space=vmem, size = 0x6000, scoped, tag = 'input window, operand 0, single buffered']
    #allocation6 [shape = 's32[1]{0}', space=sflag, size = 0x4, scoped, tag = 'scoped memory for tpu_custom_call.1']
    #allocation7 [shape = 's32[1]{0}', space=sflag, size = 0x4, scoped, tag = 'scoped memory for tpu_custom_call.1']
    #allocation8 [shape = 'u8[24576]{0}', space=vmem, size = 0x6000, scoped, tag = 'output window, operand 0, single buffered']
    %14 = vsyncpa [#allocation6], 0
    %15 = vsyncpa [#allocation7], 0
    // Predicated region
    $region2: #{tpu_custom_call.1} parent=1 // pred_check
      _
    $region3: #{tpu_custom_call.1} parent=1 // pred_check_branch
      %17 = sbr.rel (0) target = $region5
    $region4: #{tpu_custom_call.1} parent=1 // pred_region
      %19 = vsyncadd [#allocation6], 0
      %s20 = sshll.u32 %s0, 4
      %s21 = int_to_ptr.hbm [resolvable:$true] %s20
      %s22 = sshll.u32 [#allocation5], 4
      %s23 = int_to_ptr.vmem [resolvable:$true] %s22
      %28 = dma.hbm_to_vmem [thread:$0]  %s21, 768, %s23, [#allocation6], 256, 256, 16
    $region5: #{tpu_custom_call.1} parent=1 // pred_fallthru
      _
    // Predicated region
    $region6: #{tpu_custom_call.1} parent=1 // pred_check
      _
    $region7: #{tpu_custom_call.1} parent=1 // pred_check_branch
      %30 = sbr.rel (0) target = $region9
    $region8: #{tpu_custom_call.1} parent=1 // pred_region
      _
    $region9: #{tpu_custom_call.1} parent=1 // pred_fallthru
      _
    // Predicated region
    $region10: #{tpu_custom_call.1} parent=1 // pred_check
      _
    $region11: #{tpu_custom_call.1} parent=1 // pred_check_branch
      %32 = sbr.rel (0) target = $region13
    $region12: #{tpu_custom_call.1} parent=1 // pred_region
      _
    $region13: #{tpu_custom_call.1} parent=1 // pred_fallthru
      _
    // Predicated region
    $region14: #{tpu_custom_call.1} parent=1 // pred_check
      _
    $region15: #{tpu_custom_call.1} parent=1 // pred_check_branch
      %34 = sbr.rel (0) target = $region17
    $region16: #{tpu_custom_call.1} parent=1 // pred_region
      _
    $region17: #{tpu_custom_call.1} parent=1 // pred_fallthru
      _
    // Predicated region
    $region18: #{tpu_custom_call.1} parent=1 // pred_check
      _
    $region19: #{tpu_custom_call.1} parent=1 // pred_check_branch
      %36 = sbr.rel (0) target = $region21
    $region20: #{tpu_custom_call.1} parent=1 // pred_region
      _
    $region21: #{tpu_custom_call.1} parent=1 // pred_fallthru
      _
    // Predicated region
    $region22: #{tpu_custom_call.1} parent=1 // pred_check
      _
    $region23: #{tpu_custom_call.1} parent=1 // pred_check_branch
      %38 = sbr.rel (0) target = $region25
    $region24: #{tpu_custom_call.1} parent=1 // pred_region
      _
    $region25: #{tpu_custom_call.1} parent=1 // pred_fallthru
      _
    // Predicated region
    $region26: #{tpu_custom_call.1} parent=1 // pred_check
      _
    $region27: #{tpu_custom_call.1} parent=1 // pred_check_branch
      %40 = sbr.rel (0) target = $region29
    $region28: #{tpu_custom_call.1} parent=1 // pred_region
      _
    $region29: #{tpu_custom_call.1} parent=1 // pred_fallthru
      _
    // Predicated region
    $region30: #{tpu_custom_call.1} parent=1 // pred_check
      _
    $region31: #{tpu_custom_call.1} parent=1 // pred_check_branch
      %42 = sbr.rel (0) target = $region33
    $region32: #{tpu_custom_call.1} parent=1 // pred_region
      %44 = dma.done [#allocation6], 768
    $region33: #{tpu_custom_call.1} parent=1 // pred_fallthru
      _
    %v46 = vld [vmem:[#allocation5] sm:$0xff]
    %v47 = vld [vmem:[#allocation5 + $0x8] sm:$0xff]
    %v48 = vld [vmem:[#allocation5 + $0x10] sm:$0xff]
    %v49 = vld [vmem:[#allocation5 + $0x18] sm:$0xff]
    %v50 = vld [vmem:[#allocation5 + $0x20] sm:$0x33]
    %v51 = vld [vmem:[#allocation5 + $0x28] sm:$0x33]
    %v52 = vld [vmem:[%s1] sm:$0x3]
    %v53 = vld [vmem:[%s2] sm:$0xf]
    %55 = vset.pattern.permute.xlu0 0
    %56 = vperm.xlu0 %55, %v53
    %v57 = vpop.permute.xlu0 %56
    %v65 = vunpack.c.l.b16 %v46
    %v66 = vunpack.c.h.b16 %v46
    %v67 = vunpack.c.l.b16 %v47
    %v68 = vunpack.c.h.b16 %v47
    %v69 = vunpack.c.l.b16 %v48
    %v70 = vunpack.c.h.b16 %v48
    %v71 = vunpack.c.l.b16 %v49
    %v72 = vunpack.c.h.b16 %v49
    %v73 = vunpack.c.l.b16 %v50
    %v74 = vunpack.c.h.b16 %v50
    %v75 = vunpack.c.l.b16 %v51
    %v76 = vunpack.c.h.b16 %v51
    %v77 = vpack.c.b16 %v69, %v65
    %v78 = vpack.c.b16 %v70, %v66
    %v79 = vpack.c.b16 %v71, %v67
    %v80 = vpack.c.b16 %v72, %v68
    %v81 = vpack.c.b16 %v73, %v73
    %v82 = vpack.c.b16 %v74, %v74
    %v83 = vpack.c.b16 %v75, %v75
    %v84 = vpack.c.b16 %v76, %v76
    %vm89 = vcmask 162816
    %v91 = vsel %vm89, %v52, 0
    %vm93 = vcmask 1041408
    %v95 = vsel %vm93, %v81, 0
    %v98 = vsel %vm93, %v82, 0
    %v101 = vsel %vm93, %v83, 0
    %v104 = vsel %vm93, %v84, 0
    %106 = vmatpush.bf16.msra.mxu0 0
    %107 = vmatpush.bf16.msra.mxu0 0
    %108 = vmatpush.bf16.msra.mxu0 0
    %109 = vmatpush.bf16.msra.mxu0 0
    %110 = vmatpush.bf16.msra.mxu0 0
    %111 = vmatpush.bf16.msra.mxu0 0
    %112 = vmatpush.bf16.msra.mxu0 %v95
    %113 = vmatpush.bf16.msra.mxu0 %v77
    %114 = vmatmul.bf16.gmra.mxu0 %v91
    %v115 = vpop.f32.mrf.mxu0
    %v116 = vadd.f32 %v57, %v115
    %v117 = vpop.f32.mrf.mxu0
    %118 = vdwg.mxu0
    %119 = vmatpush.bf16.msra.mxu0 0
    %120 = vmatpush.bf16.msra.mxu0 0
    %121 = vmatpush.bf16.msra.mxu0 0
    %122 = vmatpush.bf16.msra.mxu0 0
    %123 = vmatpush.bf16.msra.mxu0 0
    %124 = vmatpush.bf16.msra.mxu0 0
    %125 = vmatpush.bf16.msra.mxu0 %v98
    %126 = vmatpush.bf16.msra.mxu0 %v78
    %127 = vmatmul.bf16.gmra.mxu0 %v91
    %v128 = vpop.f32.mrf.mxu0
    %v129 = vadd.f32 %v57, %v128
    %v130 = vpop.f32.mrf.mxu0
    %131 = vdwg.mxu0
    %132 = vmatpush.bf16.msra.mxu0 0
    %133 = vmatpush.bf16.msra.mxu0 0
    %134 = vmatpush.bf16.msra.mxu0 0
    %135 = vmatpush.bf16.msra.mxu0 0
    %136 = vmatpush.bf16.msra.mxu0 0
    %137 = vmatpush.bf16.msra.mxu0 0
    %138 = vmatpush.bf16.msra.mxu0 %v101
    %139 = vmatpush.bf16.msra.mxu0 %v79
    %140 = vmatmul.bf16.gmra.mxu0 %v91
    %v141 = vpop.f32.mrf.mxu0
    %v142 = vadd.f32 %v57, %v141
    %v143 = vpop.f32.mrf.mxu0
    %144 = vdwg.mxu0
    %145 = vmatpush.bf16.msra.mxu0 0
    %146 = vmatpush.bf16.msra.mxu0 0
    %147 = vmatpush.bf16.msra.mxu0 0
    %148 = vmatpush.bf16.msra.mxu0 0
    %149 = vmatpush.bf16.msra.mxu0 0
    %150 = vmatpush.bf16.msra.mxu0 0
    %151 = vmatpush.bf16.msra.mxu0 %v104
    %152 = vmatpush.bf16.msra.mxu0 %v80
    %153 = vmatmul.bf16.gmra.mxu0 %v91
    %v154 = vpop.f32.mrf.mxu0
    %v155 = vadd.f32 %v57, %v154
    %v156 = vpop.f32.mrf.mxu0
    %157 = vdwg.mxu0
    %s158 = sld [smem:[#allocation3]]
    %vm159 = vcmp.gt.f32.partialorder %v116, 0.0
    %vm160 = vcmp.gt.f32.partialorder %v129, 0.0
    %vm161 = vcmp.gt.f32.partialorder %v142, 0.0
    %vm162 = vcmp.gt.f32.partialorder %v155, 0.0
    %v163 = vstv %s158
    %v164 = vmul.f32 %v163, %v116
    %v165 = vmul.f32 %v163, %v129
    %v166 = vmul.f32 %v163, %v142
    %v167 = vmul.f32 %v163, %v155
    %v168 = vsel %vm159, %v116, %v164
    %v169 = vsel %vm160, %v129, %v165
    %v170 = vsel %vm161, %v142, %v166
    %v171 = vsel %vm162, %v155, %v167
    %v172 = vlaneseq
    %v173 = vand.u32 %v172, 127
    %v174 = vadd.s32 %v173, 128
    %v175 = vadd.s32 %v173, 256
    %v176 = vadd.s32 %v173, 384
    %v177 = vand.u32 %v173, 255
    %v178 = vand.u32 %v174, 255
    %v179 = vand.u32 %v175, 255
    %v180 = vand.u32 %v176, 255
    %181 = vst [vmem:[#allocation2] sm:$0xf] %v168
    %182 = vst [vmem:[#allocation2 + $0x8] sm:$0xf] %v169
    %183 = vst [vmem:[#allocation2 + $0x10] sm:$0xf] %v170
    %184 = vst [vmem:[#allocation2 + $0x18] sm:$0xf] %v171
    %185 = vrot.lane.b32.xlu0 %v168, 1
    %v186 = vpop.permute.xlu0 %185
    %187 = vrot.lane.b32.xlu0 %v169, 1
    %v188 = vpop.permute.xlu0 %187
    %189 = vrot.lane.b32.xlu0 %v170, 1
    %v190 = vpop.permute.xlu0 %189
    %191 = vrot.lane.b32.xlu0 %v171, 1
    %v192 = vpop.permute.xlu0 %191
    %vm193 = vcmp.lt.s32.totalorder %v173, 1
    %v194 = vsel %vm193, %v190, %v192
    %v195 = vsel %vm193, %v188, %v190
    %v196 = vsel %vm193, %v186, %v188
    %v197 = vsel %vm193, %v192, %v186
    %vm198 = vcmp.ge.s32.totalorder %v177, 1
    %vm199 = vcmp.ge.s32.totalorder %v178, 1
    %vm200 = vcmp.ge.s32.totalorder %v179, 1
    %vm201 = vcmp.ge.s32.totalorder %v180, 1
    %v202 = vsel %vm198, %v197, 0.0
    %v203 = vsel %vm199, %v196, 0.0
    %v204 = vsel %vm200, %v195, 0.0
    %v205 = vsel %vm201, %v194, 0.0
    %v210 = vrot.slane %v202, 4
    %v211 = vrot.slane %v203, 4
    %v212 = vrot.slane %v204, 4
    %v213 = vrot.slane %v205, 4
    %218 = vst [vmem:[#allocation2] sm:$0xf0] %v210
    %219 = vst [vmem:[#allocation2 + $0x8] sm:$0xf0] %v211
    %220 = vst [vmem:[#allocation2 + $0x10] sm:$0xf0] %v212
    %221 = vst [vmem:[#allocation2 + $0x18] sm:$0xf0] %v213
    %222 = vrot.lane.b32.xlu0 %v168, 127
    %v223 = vpop.permute.xlu0 %222
    %224 = vrot.lane.b32.xlu0 %v169, 127
    %v225 = vpop.permute.xlu0 %224
    %226 = vrot.lane.b32.xlu0 %v170, 127
    %v227 = vpop.permute.xlu0 %226
    %228 = vrot.lane.b32.xlu0 %v171, 127
    %v229 = vpop.permute.xlu0 %228
    %vm230 = vcmp.lt.s32.totalorder %v173, 127
    %v231 = vsel %vm230, %v227, %v229
    %v232 = vsel %vm230, %v225, %v227
    %v233 = vsel %vm230, %v223, %v225
    %v234 = vsel %vm230, %v229, %v223
    %vm235 = vcmp.lt.s32.totalorder %v177, 255
    %vm236 = vcmp.lt.s32.totalorder %v178, 255
    %vm237 = vcmp.lt.s32.totalorder %v179, 255
    %vm238 = vcmp.lt.s32.totalorder %v180, 255
    %v239 = vsel %vm235, %v233, 0.0
    %v240 = vsel %vm236, %v232, 0.0
    %v241 = vsel %vm237, %v231, 0.0
    %v242 = vsel %vm238, %v234, 0.0
    %243 = vst [vmem:[#allocation2 + $0x20] sm:$0xf] %v239
    %244 = vst [vmem:[#allocation2 + $0x28] sm:$0xf] %v240
    %245 = vst [vmem:[#allocation2 + $0x30] sm:$0xf] %v241
    %246 = vst [vmem:[#allocation2 + $0x38] sm:$0xf] %v242
    %247 = vrot.lane.b32.xlu0 %v168, 2
    %v248 = vpop.permute.xlu0 %247
    %249 = vrot.lane.b32.xlu0 %v169, 2
    %v250 = vpop.permute.xlu0 %249
    %251 = vrot.lane.b32.xlu0 %v170, 2
    %v252 = vpop.permute.xlu0 %251
    %253 = vrot.lane.b32.xlu0 %v171, 2
    %v254 = vpop.permute.xlu0 %253
    %vm255 = vcmp.lt.s32.totalorder %v173, 2
    %v256 = vsel %vm255, %v252, %v254
    %v257 = vsel %vm255, %v250, %v252
    %v258 = vsel %vm255, %v248, %v250
    %v259 = vsel %vm255, %v254, %v248
    %vm260 = vcmp.ge.s32.totalorder %v177, 2
    %vm261 = vcmp.ge.s32.totalorder %v178, 2
    %vm262 = vcmp.ge.s32.totalorder %v179, 2
    %vm263 = vcmp.ge.s32.totalorder %v180, 2
    %v264 = vsel %vm260, %v259, 0.0
    %v265 = vsel %vm261, %v258, 0.0
    %v266 = vsel %vm262, %v257, 0.0
    %v267 = vsel %vm263, %v256, 0.0
    %v272 = vrot.slane %v264, 4
    %v273 = vrot.slane %v265, 4
    %v274 = vrot.slane %v266, 4
    %v275 = vrot.slane %v267, 4
    %280 = vst [vmem:[#allocation2 + $0x20] sm:$0xf0] %v272
    %281 = vst [vmem:[#allocation2 + $0x28] sm:$0xf0] %v273
    %282 = vst [vmem:[#allocation2 + $0x30] sm:$0xf0] %v274
    %283 = vst [vmem:[#allocation2 + $0x38] sm:$0xf0] %v275
    %284 = vrot.lane.b32.xlu0 %v168, 126
    %v285 = vpop.permute.xlu0 %284
    %286 = vrot.lane.b32.xlu0 %v169, 126
    %v287 = vpop.permute.xlu0 %286
    %288 = vrot.lane.b32.xlu0 %v170, 126
    %v289 = vpop.permute.xlu0 %288
    %290 = vrot.lane.b32.xlu0 %v171, 126
    %v291 = vpop.permute.xlu0 %290
    %vm292 = vcmp.lt.s32.totalorder %v173, 126
    %v293 = vsel %vm292, %v289, %v291
    %v294 = vsel %vm292, %v287, %v289
    %v295 = vsel %vm292, %v285, %v287
    %v296 = vsel %vm292, %v291, %v285
    %vm297 = vcmp.lt.s32.totalorder %v177, 254
    %vm298 = vcmp.lt.s32.totalorder %v178, 254
    %vm299 = vcmp.lt.s32.totalorder %v179, 254
    %vm300 = vcmp.lt.s32.totalorder %v180, 254
    %v301 = vsel %vm297, %v295, 0.0
    %v302 = vsel %vm298, %v294, 0.0
    %v303 = vsel %vm299, %v293, 0.0
    %v304 = vsel %vm300, %v296, 0.0
    %305 = vst [vmem:[#allocation2 + $0x40] sm:$0xf] %v301
    %306 = vst [vmem:[#allocation2 + $0x48] sm:$0xf] %v302
    %307 = vst [vmem:[#allocation2 + $0x50] sm:$0xf] %v303
    %308 = vst [vmem:[#allocation2 + $0x58] sm:$0xf] %v304
    %309 = vrot.lane.b32.xlu0 %v168, 4
    %v310 = vpop.permute.xlu0 %309
    %311 = vrot.lane.b32.xlu0 %v169, 4
    %v312 = vpop.permute.xlu0 %311
    %313 = vrot.lane.b32.xlu0 %v170, 4
    %v314 = vpop.permute.xlu0 %313
    %315 = vrot.lane.b32.xlu0 %v171, 4
    %v316 = vpop.permute.xlu0 %315
    %vm317 = vcmp.lt.s32.totalorder %v173, 4
    %v318 = vsel %vm317, %v314, %v316
    %v319 = vsel %vm317, %v312, %v314
    %v320 = vsel %vm317, %v310, %v312
    %v321 = vsel %vm317, %v316, %v310
    %vm322 = vcmp.ge.s32.totalorder %v177, 4
    %vm323 = vcmp.ge.s32.totalorder %v178, 4
    %vm324 = vcmp.ge.s32.totalorder %v179, 4
    %vm325 = vcmp.ge.s32.totalorder %v180, 4
    %v326 = vsel %vm322, %v321, 0.0
    %v327 = vsel %vm323, %v320, 0.0
    %v328 = vsel %vm324, %v319, 0.0
    %v329 = vsel %vm325, %v318, 0.0
    %v334 = vrot.slane %v326, 4
    %v335 = vrot.slane %v327, 4
    %v336 = vrot.slane %v328, 4
    %v337 = vrot.slane %v329, 4
    %342 = vst [vmem:[#allocation2 + $0x40] sm:$0xf0] %v334
    %343 = vst [vmem:[#allocation2 + $0x48] sm:$0xf0] %v335
    %344 = vst [vmem:[#allocation2 + $0x50] sm:$0xf0] %v336
    %345 = vst [vmem:[#allocation2 + $0x58] sm:$0xf0] %v337
    %346 = vrot.lane.b32.xlu0 %v168, 124
    %v347 = vpop.permute.xlu0 %346
    %348 = vrot.lane.b32.xlu0 %v169, 124
    %v349 = vpop.permute.xlu0 %348
    %350 = vrot.lane.b32.xlu0 %v170, 124
    %v351 = vpop.permute.xlu0 %350
    %352 = vrot.lane.b32.xlu0 %v171, 124
    %v353 = vpop.permute.xlu0 %352
    %vm354 = vcmp.lt.s32.totalorder %v173, 124
    %v355 = vsel %vm354, %v351, %v353
    %v356 = vsel %vm354, %v349, %v351
    %v357 = vsel %vm354, %v347, %v349
    %v358 = vsel %vm354, %v353, %v347
    %vm359 = vcmp.lt.s32.totalorder %v177, 252
    %vm360 = vcmp.lt.s32.totalorder %v178, 252
    %vm361 = vcmp.lt.s32.totalorder %v179, 252
    %vm362 = vcmp.lt.s32.totalorder %v180, 252
    %v363 = vsel %vm359, %v357, 0.0
    %v364 = vsel %vm360, %v356, 0.0
    %v365 = vsel %vm361, %v355, 0.0
    %v366 = vsel %vm362, %v358, 0.0
    %367 = vst [vmem:[#allocation2 + $0x60] sm:$0xf] %v363
    %368 = vst [vmem:[#allocation2 + $0x68] sm:$0xf] %v364
    %369 = vst [vmem:[#allocation2 + $0x70] sm:$0xf] %v365
    %370 = vst [vmem:[#allocation2 + $0x78] sm:$0xf] %v366
    %371 = vrot.lane.b32.xlu0 %v168, 8
    %v372 = vpop.permute.xlu0 %371
    %373 = vrot.lane.b32.xlu0 %v169, 8
    %v374 = vpop.permute.xlu0 %373
    %375 = vrot.lane.b32.xlu0 %v170, 8
    %v376 = vpop.permute.xlu0 %375
    %377 = vrot.lane.b32.xlu0 %v171, 8
    %v378 = vpop.permute.xlu0 %377
    %vm379 = vcmp.lt.s32.totalorder %v173, 8
    %v380 = vsel %vm379, %v376, %v378
    %v381 = vsel %vm379, %v374, %v376
    %v382 = vsel %vm379, %v372, %v374
    %v383 = vsel %vm379, %v378, %v372
    %vm384 = vcmp.ge.s32.totalorder %v177, 8
    %vm385 = vcmp.ge.s32.totalorder %v178, 8
    %vm386 = vcmp.ge.s32.totalorder %v179, 8
    %vm387 = vcmp.ge.s32.totalorder %v180, 8
    %v388 = vsel %vm384, %v383, 0.0
    %v389 = vsel %vm385, %v382, 0.0
    %v390 = vsel %vm386, %v381, 0.0
    %v391 = vsel %vm387, %v380, 0.0
    %v396 = vrot.slane %v388, 4
    %v397 = vrot.slane %v389, 4
    %v398 = vrot.slane %v390, 4
    %v399 = vrot.slane %v391, 4
    %404 = vst [vmem:[#allocation2 + $0x60] sm:$0xf0] %v396
    %405 = vst [vmem:[#allocation2 + $0x68] sm:$0xf0] %v397
    %406 = vst [vmem:[#allocation2 + $0x70] sm:$0xf0] %v398
    %407 = vst [vmem:[#allocation2 + $0x78] sm:$0xf0] %v399
    %408 = vrot.lane.b32.xlu0 %v168, 120
    %v409 = vpop.permute.xlu0 %408
    %410 = vrot.lane.b32.xlu0 %v169, 120
    %v411 = vpop.permute.xlu0 %410
    %412 = vrot.lane.b32.xlu0 %v170, 120
    %v413 = vpop.permute.xlu0 %412
    %414 = vrot.lane.b32.xlu0 %v171, 120
    %v415 = vpop.permute.xlu0 %414
    %vm416 = vcmp.lt.s32.totalorder %v173, 120
    %v417 = vsel %vm416, %v413, %v415
    %v418 = vsel %vm416, %v411, %v413
    %v419 = vsel %vm416, %v409, %v411
    %v420 = vsel %vm416, %v415, %v409
    %vm421 = vcmp.lt.s32.totalorder %v177, 248
    %vm422 = vcmp.lt.s32.totalorder %v178, 248
    %vm423 = vcmp.lt.s32.totalorder %v179, 248
    %vm424 = vcmp.lt.s32.totalorder %v180, 248
    %v425 = vsel %vm421, %v419, 0.0
    %v426 = vsel %vm422, %v418, 0.0
    %v427 = vsel %vm423, %v417, 0.0
    %v428 = vsel %vm424, %v420, 0.0
    %429 = vst [vmem:[#allocation2 + $0x80] sm:$0xf] %v425
    %430 = vst [vmem:[#allocation2 + $0x88] sm:$0xf] %v426
    %431 = vst [vmem:[#allocation2 + $0x90] sm:$0xf] %v427
    %432 = vst [vmem:[#allocation2 + $0x98] sm:$0xf] %v428
    %433 = vrot.lane.b32.xlu0 %v168, 16
    %v434 = vpop.permute.xlu0 %433
    %435 = vrot.lane.b32.xlu0 %v169, 16
    %v436 = vpop.permute.xlu0 %435
    %437 = vrot.lane.b32.xlu0 %v170, 16
    %v438 = vpop.permute.xlu0 %437
    %439 = vrot.lane.b32.xlu0 %v171, 16
    %v440 = vpop.permute.xlu0 %439
    %vm441 = vcmp.lt.s32.totalorder %v173, 16
    %v442 = vsel %vm441, %v438, %v440
    %v443 = vsel %vm441, %v436, %v438
    %v444 = vsel %vm441, %v434, %v436
    %v445 = vsel %vm441, %v440, %v434
    %vm446 = vcmp.ge.s32.totalorder %v177, 16
    %vm447 = vcmp.ge.s32.totalorder %v178, 16
    %vm448 = vcmp.ge.s32.totalorder %v179, 16
    %vm449 = vcmp.ge.s32.totalorder %v180, 16
    %v450 = vsel %vm446, %v445, 0.0
    %v451 = vsel %vm447, %v444, 0.0
    %v452 = vsel %vm448, %v443, 0.0
    %v453 = vsel %vm449, %v442, 0.0
    %v458 = vrot.slane %v450, 4
    %v459 = vrot.slane %v451, 4
    %v460 = vrot.slane %v452, 4
    %v461 = vrot.slane %v453, 4
    %466 = vst [vmem:[#allocation2 + $0x80] sm:$0xf0] %v458
    %467 = vst [vmem:[#allocation2 + $0x88] sm:$0xf0] %v459
    %468 = vst [vmem:[#allocation2 + $0x90] sm:$0xf0] %v460
    %469 = vst [vmem:[#allocation2 + $0x98] sm:$0xf0] %v461
    %470 = vrot.lane.b32.xlu0 %v168, 112
    %v471 = vpop.permute.xlu0 %470
    %472 = vrot.lane.b32.xlu0 %v169, 112
    %v473 = vpop.permute.xlu0 %472
    %474 = vrot.lane.b32.xlu0 %v170, 112
    %v475 = vpop.permute.xlu0 %474
    %476 = vrot.lane.b32.xlu0 %v171, 112
    %v477 = vpop.permute.xlu0 %476
    %vm478 = vcmp.lt.s32.totalorder %v173, 112
    %v479 = vsel %vm478, %v475, %v477
    %v480 = vsel %vm478, %v473, %v475
    %v481 = vsel %vm478, %v471, %v473
    %v482 = vsel %vm478, %v477, %v471
    %vm483 = vcmp.lt.s32.totalorder %v177, 240
    %vm484 = vcmp.lt.s32.totalorder %v178, 240
    %vm485 = vcmp.lt.s32.totalorder %v179, 240
    %vm486 = vcmp.lt.s32.totalorder %v180, 240
    %v487 = vsel %vm483, %v481, 0.0
    %v488 = vsel %vm484, %v480, 0.0
    %v489 = vsel %vm485, %v479, 0.0
    %v490 = vsel %vm486, %v482, 0.0
    %491 = vst [vmem:[#allocation2 + $0xa0] sm:$0xf] %v487
    %492 = vst [vmem:[#allocation2 + $0xa8] sm:$0xf] %v488
    %493 = vst [vmem:[#allocation2 + $0xb0] sm:$0xf] %v489
    %494 = vst [vmem:[#allocation2 + $0xb8] sm:$0xf] %v490
    %v495 = vunpack.c.l.bf16 %v46
    %v496 = vunpack.c.h.bf16 %v46
    %v497 = vunpack.c.l.bf16 %v47
    %v498 = vunpack.c.h.bf16 %v47
    %v499 = vunpack.c.l.bf16 %v48
    %v500 = vunpack.c.h.bf16 %v48
    %v501 = vunpack.c.l.bf16 %v49
    %v502 = vunpack.c.h.bf16 %v49
    %v503 = vunpack.c.l.bf16 %v50
    %v504 = vunpack.c.h.bf16 %v50
    %v505 = vunpack.c.l.bf16 %v51
    %v506 = vunpack.c.h.bf16 %v51
    %vm519 = vcmask 1043456
    %v520 = vrot.slane %v495, 4
    %v521 = vrot.slane %v496, 4
    %v522 = vrot.slane %v497, 4
    %v523 = vrot.slane %v498, 4
    %v524 = vrot.slane %v499, 4
    %v525 = vsel %vm519, %v520, %v524
    %v526 = vrot.slane %v500, 4
    %v527 = vsel %vm519, %v521, %v526
    %v528 = vrot.slane %v501, 4
    %v529 = vsel %vm519, %v522, %v528
    %v530 = vrot.slane %v502, 4
    %v531 = vsel %vm519, %v523, %v530
    %v532 = vrot.slane %v503, 4
    %v533 = vsel %vm519, %v524, %v532
    %v534 = vrot.slane %v504, 4
    %v535 = vsel %vm519, %v526, %v534
    %v536 = vrot.slane %v505, 4
    %v537 = vsel %vm519, %v528, %v536
    %v538 = vrot.slane %v506, 4
    %v539 = vsel %vm519, %v530, %v538
    %552 = vst [vmem:[#allocation2 + $0xa0] sm:$0xf0] %v520
    %553 = vst [vmem:[#allocation2 + $0xa8] sm:$0xf0] %v521
    %554 = vst [vmem:[#allocation2 + $0xb0] sm:$0xf0] %v522
    %555 = vst [vmem:[#allocation2 + $0xb8] sm:$0xf0] %v523
    %556 = vst [vmem:[#allocation2 + $0xc0] sm:$0xff] %v525
    %557 = vst [vmem:[#allocation2 + $0xc8] sm:$0xff] %v527
    %558 = vst [vmem:[#allocation2 + $0xd0] sm:$0xff] %v529
    %559 = vst [vmem:[#allocation2 + $0xd8] sm:$0xff] %v531
    %560 = vst [vmem:[#allocation2 + $0xe0] sm:$0xff] %v533
    %561 = vst [vmem:[#allocation2 + $0xe8] sm:$0xff] %v535
    %562 = vst [vmem:[#allocation2 + $0xf0] sm:$0xff] %v537
    %563 = vst [vmem:[#allocation2 + $0xf8] sm:$0xff] %v539
    %v564 = vld [vmem:[%s3] sm:$0xff]
    %v565 = vld [vmem:[%s3 + $0x8] sm:$0xff]
    %v566 = vld [vmem:[%s3 + $0x10] sm:$0xf]
    %v567 = vld [vmem:[#allocation2] sm:$0xff]
    %v568 = vld [vmem:[#allocation2 + $0x8] sm:$0xff]
    %v569 = vld [vmem:[#allocation2 + $0x10] sm:$0xff]
    %v570 = vld [vmem:[#allocation2 + $0x18] sm:$0xff]
    %v571 = vld [vmem:[#allocation2 + $0x20] sm:$0xff]
    %v572 = vld [vmem:[#allocation2 + $0x28] sm:$0xff]
    %v573 = vld [vmem:[#allocation2 + $0x30] sm:$0xff]
    %v574 = vld [vmem:[#allocation2 + $0x38] sm:$0xff]
    %v575 = vld [vmem:[#allocation2 + $0x40] sm:$0xff]
    %v576 = vld [vmem:[#allocation2 + $0x48] sm:$0xff]
    %v577 = vld [vmem:[#allocation2 + $0x50] sm:$0xff]
    %v578 = vld [vmem:[#allocation2 + $0x58] sm:$0xff]
    %v579 = vld [vmem:[#allocation2 + $0x60] sm:$0xff]
    %v580 = vld [vmem:[#allocation2 + $0x68] sm:$0xff]
    %v581 = vld [vmem:[#allocation2 + $0x70] sm:$0xff]
    %v582 = vld [vmem:[#allocation2 + $0x78] sm:$0xff]
    %v583 = vld [vmem:[#allocation2 + $0x80] sm:$0xff]
    %v584 = vld [vmem:[#allocation2 + $0x88] sm:$0xff]
    %v585 = vld [vmem:[#allocation2 + $0x90] sm:$0xff]
    %v586 = vld [vmem:[#allocation2 + $0x98] sm:$0xff]
    %v587 = vld [vmem:[#allocation2 + $0xa0] sm:$0xff]
    %v588 = vld [vmem:[#allocation2 + $0xa8] sm:$0xff]
    %v589 = vld [vmem:[#allocation2 + $0xb0] sm:$0xff]
    %v590 = vld [vmem:[#allocation2 + $0xb8] sm:$0xff]
    %v591 = vld [vmem:[#allocation2 + $0xc0] sm:$0xff]
    %v592 = vld [vmem:[#allocation2 + $0xc8] sm:$0xff]
    %v593 = vld [vmem:[#allocation2 + $0xd0] sm:$0xff]
    %v594 = vld [vmem:[#allocation2 + $0xd8] sm:$0xff]
    %v595 = vld [vmem:[#allocation2 + $0xe0] sm:$0xff]
    %v596 = vld [vmem:[#allocation2 + $0xe8] sm:$0xff]
    %v597 = vld [vmem:[#allocation2 + $0xf0] sm:$0xff]
    %v598 = vld [vmem:[#allocation2 + $0xf8] sm:$0xff]
    %v599 = vld [vmem:[%s4] sm:$0xff]
    %v600 = vld [vmem:[%s4 + $0x8] sm:$0xff]
    %v601 = vld [vmem:[%s4 + $0x10] sm:$0xf]
    %603 = vset.pattern.permute.xlu0 0
    %604 = vperm.xlu0 %603, %v599
    %v605 = vpop.permute.xlu0 %604
    %608 = vset.pattern.permute.xlu0 0
    %609 = vperm.xlu0 %608, %v600
    %v610 = vpop.permute.xlu0 %609
    %613 = vset.pattern.permute.xlu0 0
    %614 = vperm.xlu0 %613, %v601
    %v615 = vpop.permute.xlu0 %614
    %vm617 = vcmask 523264
    %v619 = vsel %vm617, %v564, 0
    %v622 = vsel %vm617, %v565, 0
    %v625 = vsel %vm617, %v566, 0
    %627 = vmatpush.msra.mxu0 0.0
    %628 = vmatpush.msra.mxu0 0.0
    %629 = vmatpush.msra.mxu0 0.0
    %630 = vmatpush.msra.mxu0 0.0
    %631 = vmatpush.msra.mxu0 0.0
    %632 = vmatpush.msra.mxu0 0.0
    %633 = vmatpush.msra.mxu0 0.0
    %634 = vmatpush.msra.mxu0 0.0
    %635 = vmatpush.msra.mxu0 %v595
    %636 = vmatpush.msra.mxu0 %v591
    %637 = vmatpush.msra.mxu0 %v587
    %638 = vmatpush.msra.mxu0 %v583
    %639 = vmatpush.msra.mxu0 %v579
    %640 = vmatpush.msra.mxu0 %v575
    %641 = vmatpush.msra.mxu0 %v571
    %642 = vmatpush.msra.mxu0 %v567
    %643 = vmatmul.f32.gmra.mxu0 %v619
    %v644 = vpop.f32.mrf.mxu0
    %v645 = vadd.f32 %v605, %v644
    %646 = vmatmul.f32.gmra.mxu0 %v622
    %v647 = vpop.f32.mrf.mxu0
    %v648 = vadd.f32 %v610, %v647
    %649 = vmatmul.f32.gmra.mxu0 %v625
    %v650 = vpop.f32.mrf.mxu0
    %v651 = vadd.f32 %v615, %v650
    %652 = vdwg.mxu0
    %653 = vmatpush.msra.mxu0 0.0
    %654 = vmatpush.msra.mxu0 0.0
    %655 = vmatpush.msra.mxu0 0.0
    %656 = vmatpush.msra.mxu0 0.0
    %657 = vmatpush.msra.mxu0 0.0
    %658 = vmatpush.msra.mxu0 0.0
    %659 = vmatpush.msra.mxu0 0.0
    %660 = vmatpush.msra.mxu0 0.0
    %661 = vmatpush.msra.mxu0 %v596
    %662 = vmatpush.msra.mxu0 %v592
    %663 = vmatpush.msra.mxu0 %v588
    %664 = vmatpush.msra.mxu0 %v584
    %665 = vmatpush.msra.mxu0 %v580
    %666 = vmatpush.msra.mxu0 %v576
    %667 = vmatpush.msra.mxu0 %v572
    %668 = vmatpush.msra.mxu0 %v568
    %669 = vmatmul.f32.gmra.mxu0 %v619
    %v670 = vpop.f32.mrf.mxu0
    %v671 = vadd.f32 %v605, %v670
    %672 = vmatmul.f32.gmra.mxu0 %v622
    %v673 = vpop.f32.mrf.mxu0
    %v674 = vadd.f32 %v610, %v673
    %675 = vmatmul.f32.gmra.mxu0 %v625
    %v676 = vpop.f32.mrf.mxu0
    %v677 = vadd.f32 %v615, %v676
    %678 = vdwg.mxu0
    %679 = vmatpush.msra.mxu0 0.0
    %680 = vmatpush.msra.mxu0 0.0
    %681 = vmatpush.msra.mxu0 0.0
    %682 = vmatpush.msra.mxu0 0.0
    %683 = vmatpush.msra.mxu0 0.0
    %684 = vmatpush.msra.mxu0 0.0
    %685 = vmatpush.msra.mxu0 0.0
    %686 = vmatpush.msra.mxu0 0.0
    %687 = vmatpush.msra.mxu0 %v597
    %688 = vmatpush.msra.mxu0 %v593
    %689 = vmatpush.msra.mxu0 %v589
    %690 = vmatpush.msra.mxu0 %v585
    %691 = vmatpush.msra.mxu0 %v581
    %692 = vmatpush.msra.mxu0 %v577
    %693 = vmatpush.msra.mxu0 %v573
    %694 = vmatpush.msra.mxu0 %v569
    %695 = vmatmul.f32.gmra.mxu0 %v619
    %v696 = vpop.f32.mrf.mxu0
    %v697 = vadd.f32 %v605, %v696
    %698 = vmatmul.f32.gmra.mxu0 %v622
    %v699 = vpop.f32.mrf.mxu0
    %v700 = vadd.f32 %v610, %v699
    %701 = vmatmul.f32.gmra.mxu0 %v625
    %v702 = vpop.f32.mrf.mxu0
    %v703 = vadd.f32 %v615, %v702
    %704 = vdwg.mxu0
    %705 = vmatpush.msra.mxu0 0.0
    %706 = vmatpush.msra.mxu0 0.0
    %707 = vmatpush.msra.mxu0 0.0
    %708 = vmatpush.msra.mxu0 0.0
    %709 = vmatpush.msra.mxu0 0.0
    %710 = vmatpush.msra.mxu0 0.0
    %711 = vmatpush.msra.mxu0 0.0
    %712 = vmatpush.msra.mxu0 0.0
    %713 = vmatpush.msra.mxu0 %v598
    %714 = vmatpush.msra.mxu0 %v594
    %715 = vmatpush.msra.mxu0 %v590
    %716 = vmatpush.msra.mxu0 %v586
    %717 = vmatpush.msra.mxu0 %v582
    %718 = vmatpush.msra.mxu0 %v578
    %719 = vmatpush.msra.mxu0 %v574
    %720 = vmatpush.msra.mxu0 %v570
    %721 = vmatmul.f32.gmra.mxu0 %v619
    %v722 = vpop.f32.mrf.mxu0
    %v723 = vadd.f32 %v605, %v722
    %724 = vmatmul.f32.gmra.mxu0 %v622
    %v725 = vpop.f32.mrf.mxu0
    %v726 = vadd.f32 %v610, %v725
    %727 = vmatmul.f32.gmra.mxu0 %v625
    %v728 = vpop.f32.mrf.mxu0
    %v729 = vadd.f32 %v615, %v728
    %730 = vdwg.mxu0
    %s731 = sld [smem:[#allocation4]]
    %vm732 = vcmp.gt.f32.partialorder %v645, 0.0
    %vm733 = vcmp.gt.f32.partialorder %v671, 0.0
    %vm734 = vcmp.gt.f32.partialorder %v697, 0.0
    %vm735 = vcmp.gt.f32.partialorder %v723, 0.0
    %vm736 = vcmp.gt.f32.partialorder %v648, 0.0
    %vm737 = vcmp.gt.f32.partialorder %v674, 0.0
    %vm738 = vcmp.gt.f32.partialorder %v700, 0.0
    %vm739 = vcmp.gt.f32.partialorder %v726, 0.0
    %vm740 = vcmp.gt.f32.partialorder %v651, 0.0
    %vm741 = vcmp.gt.f32.partialorder %v677, 0.0
    %vm742 = vcmp.gt.f32.partialorder %v703, 0.0
    %vm743 = vcmp.gt.f32.partialorder %v729, 0.0
    %v744 = vstv %s731
    %v745 = vmul.f32 %v744, %v645
    %v746 = vmul.f32 %v744, %v671
    %v747 = vmul.f32 %v744, %v697
    %v748 = vmul.f32 %v744, %v723
    %v749 = vmul.f32 %v744, %v648
    %v750 = vmul.f32 %v744, %v674
    %v751 = vmul.f32 %v744, %v700
    %v752 = vmul.f32 %v744, %v726
    %v753 = vmul.f32 %v744, %v651
    %v754 = vmul.f32 %v744, %v677
    %v755 = vmul.f32 %v744, %v703
    %v756 = vmul.f32 %v744, %v729
    %v757 = vsel %vm732, %v645, %v745
    %v758 = vsel %vm733, %v671, %v746
    %v759 = vsel %vm734, %v697, %v747
    %v760 = vsel %vm735, %v723, %v748
    %v761 = vsel %vm736, %v648, %v749
    %v762 = vsel %vm737, %v674, %v750
    %v763 = vsel %vm738, %v700, %v751
    %v764 = vsel %vm739, %v726, %v752
    %v765 = vsel %vm740, %v651, %v753
    %v766 = vsel %vm741, %v677, %v754
    %v767 = vsel %vm742, %v703, %v755
    %v768 = vsel %vm743, %v729, %v756
    %v769 = vpack.c.bf16 %v758, %v757
    %v770 = vpack.c.bf16 %v760, %v759
    %v771 = vpack.c.bf16 %v762, %v761
    %v772 = vpack.c.bf16 %v764, %v763
    %v773 = vpack.c.bf16 %v766, %v765
    %v774 = vpack.c.bf16 %v768, %v767
    %775 = vst [vmem:[#allocation8] sm:$0xff] %v769
    %776 = vst [vmem:[#allocation8 + $0x8] sm:$0xff] %v770
    %777 = vst [vmem:[#allocation8 + $0x10] sm:$0xff] %v771
    %778 = vst [vmem:[#allocation8 + $0x18] sm:$0xff] %v772
    %779 = vst [vmem:[#allocation8 + $0x20] sm:$0x33] %v773
    %780 = vst [vmem:[#allocation8 + $0x28] sm:$0x33] %v774
    // Predicated region
    $region34: #{tpu_custom_call.1} parent=1 // pred_check
      _
    $region35: #{tpu_custom_call.1} parent=1 // pred_check_branch
      %782 = sbr.rel (0) target = $region37
    $region36: #{tpu_custom_call.1} parent=1 // pred_region
      %784 = vsyncadd [#allocation7], 0
      %s785 = sshll.u32 [#allocation8], 4
      %s786 = int_to_ptr.vmem [resolvable:$true] %s785
      %s787 = sshll.u32 %s7, 4
      %s788 = int_to_ptr.hbm [resolvable:$true] %s787
      %793 = dma.vmem_to_hbm [thread:$0]  %s786, 768, %s788, [#allocation7], 256, 256, 16
    $region37: #{tpu_custom_call.1} parent=1 // pred_fallthru
      _
    // Predicated region
    $region38: #{tpu_custom_call.1} parent=1 // pred_check
      _
    $region39: #{tpu_custom_call.1} parent=1 // pred_check_branch
      %795 = sbr.rel (0) target = $region41
    $region40: #{tpu_custom_call.1} parent=1 // pred_region
      %797 = dma.done [#allocation7], 768
    $region41: #{tpu_custom_call.1} parent=1 // pred_fallthru
      _
    %798 = vsyncpa [#allocation6], 1
    %799 = vsyncpa [#allocation7], 1

</llo_original>
